<compile_context>
chip_gen: v5e
topology: v5e:2x2
jax: 0.10.0
libtpu: 0.0.40
codegen_flags: <defaults>
</compile_context>

<pallas_src>
import jax
import jax.numpy as jnp
from jax.experimental import pallas as pl
from jax.experimental.pallas import tpu as pltpu


def _h_swish_kernel(x_ref, o_ref):
    x = x_ref[...]
    # relu6(x + 3) / 6 == clip(x + 3, 0, 6) * (1/6), computed in the input
    # dtype (matches torch running in that dtype).
    o_ref[...] = (x * (jnp.clip(x + 3.0, 0.0, 6.0) * (1.0 / 6.0))).astype(o_ref.dtype)


_LANE_CANDIDATES = (2048, 1024, 512, 256, 128)
_TARGET_BLOCK_BYTES = 4 * 1024 * 1024  # ~4 MiB/block; in+out double-buffered ~16 MiB VMEM


def _sublane_multiple(dtype) -> int:
    itemsize = jnp.dtype(dtype).itemsize
    return {4: 8, 2: 16, 1: 32}.get(itemsize, 8)


def _run_2d(x2d: jax.Array, tile_rows: int, lanes: int) -> jax.Array:
    rows = x2d.shape[0]
    grid = (pl.cdiv(rows, tile_rows),)
    return pl.pallas_call(
        _h_swish_kernel,
        out_shape=jax.ShapeDtypeStruct(x2d.shape, x2d.dtype),
        grid_spec=pltpu.PrefetchScalarGridSpec(
            num_scalar_prefetch=0,
            grid=grid,
            in_specs=[pl.BlockSpec((tile_rows, lanes), lambda i: (i, 0))],
            out_specs=pl.BlockSpec((tile_rows, lanes), lambda i: (i, 0)),
        ),
        input_output_aliases={0: 0},  # in-place result (torch inplace=True)
        compiler_params=pltpu.CompilerParams(
            dimension_semantics=("parallel",),
            vmem_limit_bytes=32 * 1024 * 1024,
        ),
    )(x2d)


def h_swish(x: jax.Array) -> jax.Array:
    """Hard-swish, elementwise; matches torch h_swish.forward exactly."""
    orig_shape = x.shape
    dtype = x.dtype
    n = int(x.size)
    if n == 0:
        return x

    itemsize = jnp.dtype(dtype).itemsize
    sublane = _sublane_multiple(dtype)

    lanes = next((l for l in _LANE_CANDIDATES if n % l == 0), None)

    if lanes is None:
        # Ragged size (rare for conv activations): pad the flat vector to a
        # (sublane*128)-aligned length. Safe because h_swish(0) == 0 and the
        # valid prefix is sliced back off below.
        lanes = 128
        align = sublane * lanes
        padded_n = ((n + align - 1) // align) * align
        flat = jnp.pad(x.reshape(-1), (0, padded_n - n))
        rows = padded_n // lanes
    else:
        flat = x.reshape(-1)
        rows = n // lanes

    x2d = flat.reshape(rows, lanes)

    if rows <= sublane:
        # Full-extent block along the row axis (exempt from the sublane rule).
        tile_rows = rows
    else:
        max_tile = (rows // sublane) * sublane
        tile_rows = (_TARGET_BLOCK_BYTES // (lanes * itemsize) // sublane) * sublane
        tile_rows = max(sublane, min(tile_rows, max_tile))
        # Keep at least 2 grid steps so v7x's two TensorCores both get work.
        if pl.cdiv(rows, tile_rows) < 2 and rows >= 2 * sublane:
            half = (rows + 1) // 2
            tile_rows = min(((half + sublane - 1) // sublane) * sublane, max_tile)

    out2d = _run_2d(x2d, tile_rows, lanes)

    out_flat = out2d.reshape(-1)
    if out_flat.shape[0] != n:
        out_flat = out_flat[:n]
    return out_flat.reshape(orig_shape)


def _ref_h_swish(x):
    return x * (jnp.clip(x + 3.0, 0.0, 6.0) * (1.0 / 6.0))


if __name__ == "__main__":
    key = jax.random.PRNGKey(0)
    k0, k1, k2 = jax.random.split(key, 3)

    # Primary check: NCHW input consistent with the conv-net context of dfdrnet.py
    x = jax.random.normal(k0, (2, 4, 16, 16), dtype=jnp.float32) * 4.0
    y = jax.block_until_ready(h_swish(x))
    assert y.shape == x.shape and y.dtype == x.dtype
    assert jnp.allclose(y, _ref_h_swish(x), atol=1e-6, rtol=1e-6)

    # Multi-block grid path (several grid steps, wide lanes).
    x_big = jax.random.normal(k1, (8, 32, 32, 32), dtype=jnp.float32) * 4.0
    y_big = jax.block_until_ready(h_swish(x_big))
    assert jnp.allclose(y_big, _ref_h_swish(x_big), atol=1e-6, rtol=1e-6)

    # bf16 path (dtype-aware sublane handling).
    x_bf16 = (jax.random.normal(k2, (2, 4, 16, 16), dtype=jnp.float32) * 4.0).astype(jnp.bfloat16)
    y_bf16 = jax.block_until_ready(h_swish(x_bf16))
    assert y_bf16.dtype == jnp.bfloat16
    assert jnp.allclose(
        y_bf16.astype(jnp.float32),
        _ref_h_swish(x_bf16).astype(jnp.float32),
        atol=5e-2,
        rtol=5e-2,
    )

    print("KERNEL_OK")
</pallas_src>

<mosaic_0001>
module attributes {stable_mosaic.version = 11 : i64} {
  func.func @_h_swish_kernel(%arg0: i32, %arg1: memref<1x2048xf32, #tpu.memory_space<vmem>>, %arg2: memref<1x2048xf32, #tpu.memory_space<vmem>>) attributes {dimension_semantics = [#tpu.dimension_semantics<parallel>], iteration_bounds = array<i64: 1>, scalar_prefetch = 0 : i64, scratch_operands = 0 : i64, tpu.core_type = #tpu.core_type<tc>, window_params = [{transform_indices = @transform_0, window_bounds = array<i64: 1, 2048>}, {transform_indices = @transform_1, window_bounds = array<i64: 1, 2048>}]} {
    %c0 = arith.constant 0 : index
    %c0_0 = arith.constant 0 : index
    %0 = vector.load %arg1[%c0, %c0_0] : memref<1x2048xf32, #tpu.memory_space<vmem>>, vector<1x2048xf32>
    %cst = arith.constant 3.000000e+00 : f32
    %1 = vector.broadcast %cst : f32 to vector<1x2048xf32>
    %2 = arith.addf %0, %1 : vector<1x2048xf32>
    %cst_1 = arith.constant 0.000000e+00 : f32
    %cst_2 = arith.constant 6.000000e+00 : f32
    %3 = vector.broadcast %cst_1 : f32 to vector<1x2048xf32>
    %4 = arith.maximumf %3, %2 : vector<1x2048xf32>
    %5 = vector.broadcast %cst_2 : f32 to vector<1x2048xf32>
    %6 = arith.minimumf %5, %4 : vector<1x2048xf32>
    %cst_3 = arith.constant 0.166666672 : f32
    %7 = vector.broadcast %cst_3 : f32 to vector<1x2048xf32>
    %8 = arith.mulf %6, %7 : vector<1x2048xf32>
    %9 = arith.mulf %0, %8 : vector<1x2048xf32>
    %c0_4 = arith.constant 0 : index
    %c0_5 = arith.constant 0 : index
    %10 = vector.load %arg2[%c0_4, %c0_5] : memref<1x2048xf32, #tpu.memory_space<vmem>>, vector<1x2048xf32>
    tpu.vector_store %arg2[%c0_4, %c0_5], %9 {strides = array<i32>} : memref<1x2048xf32, #tpu.memory_space<vmem>>, vector<1x2048xf32>,
    return
  }
  func.func @transform_0(%arg0: i32) -> (i32, i32) {
    %c0_i32 = arith.constant 0 : i32
    %c0_i32_0 = arith.constant 0 : i32
    return %arg0, %c0_i32 : i32, i32
  }
  func.func @transform_1(%arg0: i32) -> (i32, i32) {
    %c0_i32 = arith.constant 0 : i32
    %c0_i32_0 = arith.constant 0 : i32
    return %arg0, %c0_i32 : i32, i32
  }
}

</mosaic_0001>

<llo_original>
// kernel: tpu_custom_call.1
$region0: #{tpu_custom_call.1}
  #allocation0 [shape = 'u32[]', space=smem, size = 0x4, offset = 0x4, fixed_abs, tag = 'smem constant byte address 0x4 - core index']
  #allocation1 [shape = 'u32[72,128]{1,0:T(1,128)}', space=vmem, size = 0x9000, scoped, tag = 'internal scratch']
  %s0 = inlined_call_operand.hbm [shape: f32[1,2048], index: 0, kind: input, shape index: {}, may-alias: {0,1}]
  %s1 = inlined_call_operand.hbm [shape: f32[1,2048], index: 1, kind: output, shape index: {}, may-alias: {0,1}]
  %s2 = sld [smem:[#allocation0]]
  $region18: #{tpu_custom_call.1} parent=0
    _
  %s4 = ssub.s32 1, %s2
  %s5 = scalar_select 0, %s4, %s2
  $region1: #{tpu_custom_call.1} parent=0
    #allocation2 [shape = 'u8[8192]{0}', space=vmem, size = 0x2000, scoped, tag = 'input window, operand 0, single buffered']
    #allocation3 [shape = 's32[1]{0}', space=sflag, size = 0x4, scoped, tag = 'scoped memory for tpu_custom_call.1']
    #allocation4 [shape = 's32[1]{0}', space=sflag, size = 0x4, scoped, tag = 'scoped memory for tpu_custom_call.1']
    #allocation5 [shape = 'u8[8192]{0}', space=vmem, size = 0x2000, scoped, tag = 'output window, operand 0, single buffered']
    %6 = vsyncpa [#allocation3], 0
    %7 = vsyncpa [#allocation4], 0
    // Predicated region
    $region2: #{tpu_custom_call.1} parent=1 // pred_check
      _
    $region3: #{tpu_custom_call.1} parent=1 // pred_check_branch
      %9 = sbr.rel (0) target = $region5
    $region4: #{tpu_custom_call.1} parent=1 // pred_region
      %11 = vsyncadd [#allocation3], 0
      %s13 = sshll.u32 %s0, 4
      %s14 = int_to_ptr.hbm [resolvable:$true] %s13
      %s15 = sshll.u32 [#allocation2], 4
      %s16 = int_to_ptr.vmem [resolvable:$true] %s15
      %18 = dma.hbm_to_vmem [thread:$0]  %s14, 256, %s16, [#allocation3]
    $region5: #{tpu_custom_call.1} parent=1 // pred_fallthru
      _
    // Predicated region
    $region6: #{tpu_custom_call.1} parent=1 // pred_check
      _
    $region7: #{tpu_custom_call.1} parent=1 // pred_check_branch
      %20 = sbr.rel (0) target = $region9
    $region8: #{tpu_custom_call.1} parent=1 // pred_region
      %22 = dma.done [#allocation3], 256
    $region9: #{tpu_custom_call.1} parent=1 // pred_fallthru
      _
    %v23 = vld [vmem:[#allocation2] sm:$0xff]
    %v24 = vld [vmem:[#allocation2 + $0x8] sm:$0xff]
    %v25 = vadd.f32 %v23, 3.0
    %v26 = vadd.f32 %v24, 3.0
    %v27 = vmax.f32 %v25, 0.0
    %v28 = vmax.f32 %v26, 0.0
    %v29 = vmin.f32 %v27, 6.0
    %v30 = vmin.f32 %v28, 6.0
    %v31 = vmul.f32 %v29, 0.16666667
    %v32 = vmul.f32 %v30, 0.16666667
    %v33 = vmul.f32 %v23, %v31
    %v34 = vmul.f32 %v24, %v32
    %35 = vst [vmem:[#allocation5] sm:$0xff] %v33
    %36 = vst [vmem:[#allocation5 + $0x8] sm:$0xff] %v34
    // Predicated region
    $region10: #{tpu_custom_call.1} parent=1 // pred_check
      _
    $region11: #{tpu_custom_call.1} parent=1 // pred_check_branch
      %38 = sbr.rel (0) target = $region13
    $region12: #{tpu_custom_call.1} parent=1 // pred_region
      %40 = vsyncadd [#allocation4], 0
      %s42 = sshll.u32 [#allocation5], 4
      %s43 = int_to_ptr.vmem [resolvable:$true] %s42
      %s44 = sshll.u32 %s1, 4
      %s45 = int_to_ptr.hbm [resolvable:$true] %s44
      %47 = dma.vmem_to_hbm [thread:$0]  %s43, 256, %s45, [#allocation4]
    $region13: #{tpu_custom_call.1} parent=1 // pred_fallthru
      _
    // Predicated region
    $region14: #{tpu_custom_call.1} parent=1 // pred_check
      _
    $region15: #{tpu_custom_call.1} parent=1 // pred_check_branch
      %49 = sbr.rel (0) target = $region17
    $region16: #{tpu_custom_call.1} parent=1 // pred_region
      %51 = dma.done [#allocation4], 256
    $region17: #{tpu_custom_call.1} parent=1 // pred_fallthru
      _
    %52 = vsyncpa [#allocation3], 1
    %53 = vsyncpa [#allocation4], 1

</llo_original>
